<compile_context>
chip_gen: v6e
topology: v6e:2x2x1
jax: 0.10.0
libtpu: 0.0.40
codegen_flags: <defaults>
</compile_context>

<pallas_src>
import functools
import math

import jax
import jax.numpy as jnp
import numpy as np
from jax.experimental import pallas as pl
from jax.experimental.pallas import tpu as pltpu

LANE = 128          # lane width — edge axis is padded to a multiple of this
C_PAD = 128         # lane-dense padded class axis (full 128-lane stores)
NEG_BIG = -1e30     # padding logit (finite; exp(pad - max) underflows to 0)


# --------------------------------------------------------------------------
# Pallas kernel: ALL masked-GCN passes in one invocation (no grid)
# --------------------------------------------------------------------------
def _explainer_batched_kernel(sig_ref, noise_ref, sdstT_tiled_ref,
                              sdstT_row_ref, ssrcw_ref, pexp_ref, agg_ref,
                              m1_ref, b1_ref, w2_ref, b2_ref, out_ref):
    """pass 0 : eweight = 1                          (original prediction)
       pass 1 : eweight = sigmoid(mask)              (sufficiency)
       pass p>=2 : eweight = 1 - sigmoid(mask) + noise_p   (necessity)

    Factored adjacency (never materialized densely):
        A_w @ Y == (sdstT * u) @ (ssrc @ Y)
    Layer 2 is reassociated to the single idx_node row:
        z_p = ((sdstT[idx] * u_p) @ ssrc) @ H1_p @ W2 + b2
    noise_ref rows 0 and 1 MUST be zero (passes 0/1 are exact)."""
    P = noise_ref.shape[0]

    sig = sig_ref[...]                                   # (1, E)
    noise = noise_ref[...]                               # (P, E)
    pidx = jax.lax.broadcasted_iota(jnp.int32, (P, 1), 0)
    is_ori = (pidx == 0).astype(jnp.float32)
    is_suff = (pidx == 1).astype(jnp.float32)
    is_nec = 1.0 - is_ori - is_suff
    u = is_ori + is_suff * sig + is_nec * (1.0 - sig) + noise        # (P, E)

    # Layer 1, all passes batched into the matmul M dimension:
    #   aw[p*N + n, :] = u[p, :] * sdstT[n, :]
    #   H1 = relu(aw @ (ssrc @ X @ W1) + b1)          -> (P*N, H)
    u_rows = jnp.dot(pexp_ref[...], u,
                     preferred_element_type=jnp.float32)             # (P*N, E)
    aw = u_rows * sdstT_tiled_ref[...]                               # (P*N, E)
    h1 = jnp.dot(aw, m1_ref[...],
                 preferred_element_type=jnp.float32) + b1_ref[...]
    h1 = jnp.maximum(h1, 0.0)                                        # (P*N, H)

    # Layer 2 (reassociated): r_p = (sdstT[idx] * u_p) @ ssrc is a length-N
    # row; lay the P rows block-diagonally (agg mask) so one 2-D matmul
    # contracts them against the batched H1.
    r_bd = agg_ref[...] * jnp.dot(u * sdstT_row_ref[...], ssrcw_ref[...],
                                  preferred_element_type=jnp.float32)  # (P, P*N)
    z = jnp.dot(jnp.dot(r_bd, h1, preferred_element_type=jnp.float32),
                w2_ref[...], preferred_element_type=jnp.float32) \
        + b2_ref[...]                                                # (P, C_PAD)

    # Row softmax over lane-padded classes (padded logits NEG_BIG -> prob 0).
    z = z - jnp.max(z, axis=-1, keepdims=True)
    e = jnp.exp(z)
    out_ref[...] = e * pl.reciprocal(jnp.sum(e, axis=-1, keepdims=True),
                                     approx=True)


def _fused_gcn_passes(sig_row, noise_all, sdstT_tiled, sdstT_row, ssrc_wide,
                      pexp, agg, m1, b1, w2p, b2p):
    """Single pallas_call (no grid): every operand fully resident in VMEM."""
    P = noise_all.shape[0]
    vmem = pl.BlockSpec(memory_space=pltpu.MemorySpace.VMEM)
    return pl.pallas_call(
        _explainer_batched_kernel,
        out_shape=jax.ShapeDtypeStruct((P, C_PAD), jnp.float32),
        in_specs=[vmem] * 11,
        out_specs=vmem,
    )(sig_row, noise_all, sdstT_tiled, sdstT_row, ssrc_wide, pexp, agg,
      m1, b1, w2p, b2p)
    # NOTE: at real graph sizes, add an E-tiled reduction grid axis + bf16 MXU
    # operands to stay inside v7x's 64 MiB VMEM; unnecessary at toy scale.


# --------------------------------------------------------------------------
# ExplainerModule forward (type_ex='e', objective='pns') — one jitted program
# --------------------------------------------------------------------------
@functools.partial(jax.jit, static_argnames=("idx_node", "n_1"))
def explainer_forward_pns(mask_edge, noise_nec, sdstT, ssrc, feats,
                          w1, b1, w2, b2, *, idx_node, n_1):
    """Returns (label, pr_ori, pr_edge_suff, pr_edge_nec, mask_edge_sigmoid)."""
    if n_1 < 1:
        raise ValueError("n_1 must be >= 1 (necessity mean over empty set).")
    E = mask_edge.shape[0]
    N = sdstT.shape[0]
    H = w1.shape[1]
    C = w2.shape[1]
    P = 2 + n_1

    mask_edge_sigmoid = jax.nn.sigmoid(mask_edge)                    # (E,)

    # Lane-pad the edge axis: padded edges have zero incidence rows/cols so
    # their (arbitrary) eweight never contributes.
    E_pad = ((E + LANE - 1) // LANE) * LANE
    sig_row = jnp.zeros((1, E_pad), jnp.float32).at[0, :E].set(mask_edge_sigmoid)
    noise_all = jnp.zeros((P, E_pad), jnp.float32).at[2:, :E].set(
        noise_nec.reshape(n_1, E))                                   # rows 0/1 zero
    sdstT_p = jnp.zeros((N, E_pad), jnp.float32).at[:, :E].set(sdstT)
    ssrc_p = jnp.zeros((E_pad, N), jnp.float32).at[:E, :].set(ssrc)

    # Pass-invariant hoists (independent of eweight).
    m1 = jnp.dot(ssrc_p, jnp.dot(feats, w1))                         # (E_pad, H)
    sdstT_row = sdstT_p[idx_node:idx_node + 1, :]                    # (1, E_pad)

    # Tiny constant 0/1 matrices so the kernel stays purely 2-D matmuls:
    sdstT_tiled = jnp.tile(sdstT_p, (P, 1))          # (P*N, E): row j = sdstT[j % N]
    ssrc_wide = jnp.tile(ssrc_p, (1, P))             # (E_pad, P*N)
    eye = jnp.eye(P, dtype=jnp.float32)
    pexp = jnp.repeat(eye, N, axis=0)                # (P*N, P): row j -> pass j // N
    agg = jnp.repeat(eye, N, axis=1)                 # (P, P*N): block-diag selector

    # Lane-pad the classifier to 128 classes (full-lane output stores).
    w2p = jnp.zeros((H, C_PAD), jnp.float32).at[:, :C].set(w2)
    b2p = jnp.full((1, C_PAD), NEG_BIG, jnp.float32).at[:, :C].set(
        b2.reshape(1, C))

    out = _fused_gcn_passes(sig_row, noise_all, sdstT_tiled, sdstT_row,
                            ssrc_wide, pexp, agg, m1, b1.reshape(1, H),
                            w2p, b2p)                                # (P, C_PAD)
    probs = out[:, :C]                                               # (P, C)

    # original_prediction(): label / pr_ori from the unmasked pass (p == 0),
    # then gather the same class for sufficiency / necessity — all on device.
    label = jnp.argmax(probs[0])
    col = jnp.take(probs, label, axis=1)                             # (P,)
    pr_ori = col[0]
    pr_edge_suff = col[1]
    pr_edge_nec = jnp.mean(col[2:])
    return label, pr_ori, pr_edge_suff, pr_edge_nec, mask_edge_sigmoid


# --------------------------------------------------------------------------
# Main
# --------------------------------------------------------------------------
if __name__ == "__main__":
    # Small synthetic graph + frozen GNN, deterministic from PRNGKey(0).
    N, E, D, H, C = 8, 24, 16, 32, 8   # nodes, edges, feat dim, hidden, classes
    idx_node = 3
    n_1 = 2
    epsilon = 0.025

    root = jax.random.PRNGKey(0)
    (k_src, k_dst, k_x, k_w1, k_b1, k_w2, k_b2, k_mask,
     k_noise) = jax.random.split(root, 9)

    src = jax.random.randint(k_src, (E,), 0, N)
    dst = jax.random.randint(k_dst, (E,), 0, N)
    ssrc = jax.nn.one_hot(src, N, dtype=jnp.float32)           # (E, N)
    sdstT = jax.nn.one_hot(dst, N, dtype=jnp.float32).T        # (N, E)
    features_ori = jax.random.normal(k_x, (N, D), jnp.float32)

    # Frozen 2-layer GCN weights — synthetic stand-in for the DGL model.
    w1 = jax.random.normal(k_w1, (D, H), jnp.float32) / math.sqrt(D)
    b1 = jax.random.normal(k_b1, (1, H), jnp.float32) * 0.01
    w2 = jax.random.normal(k_w2, (H, C), jnp.float32) / math.sqrt(H)
    b2 = jax.random.normal(k_b2, (1, C), jnp.float32) * 0.01

    # mask_edge parameter: uniform(-stdv, stdv), stdv = 1/sqrt(num_edges)
    stdv_edge = 1.0 / math.sqrt(E)
    mask_edge = jax.random.uniform(k_mask, (E,), jnp.float32,
                                   minval=-stdv_edge, maxval=stdv_edge)

    # Necessity noise: one draw for all n_1 passes (reused by the reference).
    noise_nec = jax.random.uniform(k_noise, (n_1, E), jnp.float32,
                                   minval=-epsilon, maxval=epsilon)

    label, pr_ori, pr_suff, pr_nec, mask_sigmoid = explainer_forward_pns(
        mask_edge, noise_nec, sdstT, ssrc, features_ori, w1, b1, w2, b2,
        idx_node=idx_node, n_1=n_1)
    label, pr_ori, pr_suff, pr_nec, mask_sigmoid = jax.block_until_ready(
        (label, pr_ori, pr_suff, pr_nec, mask_sigmoid))

    # ----- pure-JAX reference (dense weighted adjacency) for sanity checks --
    def ref_probs(eweight):
        A = sdstT @ (eweight[:, None] * ssrc)
        h = jnp.maximum(A @ features_ori @ w1 + b1, 0.0)
        z = A @ h @ w2 + b2
        return jax.nn.softmax(z, axis=-1)

    ref_ori = ref_probs(jnp.ones((E,), jnp.float32))
    ref_label = int(jnp.argmax(ref_ori[idx_node]))
    ref_pr_ori = float(ref_ori[idx_node, ref_label])
    ref_pr_suff = float(
        ref_probs(jax.nn.sigmoid(mask_edge))[idx_node, ref_label])
    ref_pr_nec = float(np.mean([
        float(ref_probs(1.0 - jax.nn.sigmoid(mask_edge)
                        + noise_nec[i])[idx_node, ref_label])
        for i in range(n_1)]))

    # Tolerances slightly loosened vs. pure-f32: the softmax denominator uses
    # the EUP approximate reciprocal (pl.reciprocal(approx=True)).
    assert int(label) == ref_label, (int(label), ref_label)
    np.testing.assert_allclose(float(pr_ori), ref_pr_ori, rtol=5e-3, atol=5e-4)
    np.testing.assert_allclose(float(pr_suff), ref_pr_suff, rtol=5e-3, atol=5e-4)
    np.testing.assert_allclose(float(pr_nec), ref_pr_nec, rtol=5e-3, atol=5e-4)
    np.testing.assert_allclose(np.asarray(mask_sigmoid),
                               np.asarray(jax.nn.sigmoid(mask_edge)),
                               rtol=1e-6, atol=1e-7)
    assert mask_sigmoid.shape == (E,)
    assert np.isfinite(float(pr_suff)) and np.isfinite(float(pr_nec))

    print("KERNEL_OK")
</pallas_src>

<mosaic_0001>
module attributes {stable_mosaic.version = 11 : i64} {
  func.func @_explainer_batched_kernel(%arg0: memref<1x128xf32, #tpu.memory_space<vmem>>, %arg1: memref<4x128xf32, #tpu.memory_space<vmem>>, %arg2: memref<32x128xf32, #tpu.memory_space<vmem>>, %arg3: memref<1x128xf32, #tpu.memory_space<vmem>>, %arg4: memref<128x32xf32, #tpu.memory_space<vmem>>, %arg5: memref<32x4xf32, #tpu.memory_space<vmem>>, %arg6: memref<4x32xf32, #tpu.memory_space<vmem>>, %arg7: memref<128x32xf32, #tpu.memory_space<vmem>>, %arg8: memref<1x32xf32, #tpu.memory_space<vmem>>, %arg9: memref<32x128xf32, #tpu.memory_space<vmem>>, %arg10: memref<1x128xf32, #tpu.memory_space<vmem>>, %arg11: memref<4x128xf32, #tpu.memory_space<vmem>>) attributes {dimension_semantics = [], scalar_prefetch = 0 : i64, scratch_operands = 0 : i64, tpu.core_type = #tpu.core_type<tc>} {
    %c0 = arith.constant 0 : index
    %c0_0 = arith.constant 0 : index
    %0 = vector.load %arg0[%c0, %c0_0] : memref<1x128xf32, #tpu.memory_space<vmem>>, vector<1x128xf32>
    %c0_1 = arith.constant 0 : index
    %c0_2 = arith.constant 0 : index
    %1 = vector.load %arg1[%c0_1, %c0_2] : memref<4x128xf32, #tpu.memory_space<vmem>>, vector<4x128xf32>
    %2 = tpu.iota {dimensions = array<i32: 0>} : vector<4x1xi32>
    %c0_i32 = arith.constant 0 : i32
    %3 = vector.broadcast %c0_i32 : i32 to vector<4x1xi32>
    %4 = arith.cmpi eq, %2, %3 : vector<4x1xi32>
    %5 = arith.extui %4 : vector<4x1xi1> to vector<4x1xi32>
    %6 = arith.sitofp %5 : vector<4x1xi32> to vector<4x1xf32>
    %c1_i32 = arith.constant 1 : i32
    %7 = vector.broadcast %c1_i32 : i32 to vector<4x1xi32>
    %8 = arith.cmpi eq, %2, %7 : vector<4x1xi32>
    %9 = arith.extui %8 : vector<4x1xi1> to vector<4x1xi32>
    %10 = arith.sitofp %9 : vector<4x1xi32> to vector<4x1xf32>
    %cst = arith.constant 1.000000e+00 : f32
    %11 = vector.broadcast %cst : f32 to vector<4x1xf32>
    %12 = arith.subf %11, %6 : vector<4x1xf32>
    %13 = arith.subf %12, %10 : vector<4x1xf32>
    %14 = vector.broadcast %10 : vector<4x1xf32> to vector<4x128xf32>
    %15 = vector.broadcast %0 : vector<1x128xf32> to vector<4x128xf32>
    %16 = arith.mulf %14, %15 : vector<4x128xf32>
    %17 = vector.broadcast %6 : vector<4x1xf32> to vector<4x128xf32>
    %18 = arith.addf %17, %16 : vector<4x128xf32>
    %cst_3 = arith.constant 1.000000e+00 : f32
    %19 = vector.broadcast %cst_3 : f32 to vector<1x128xf32>
    %20 = arith.subf %19, %0 : vector<1x128xf32>
    %21 = vector.broadcast %13 : vector<4x1xf32> to vector<4x128xf32>
    %22 = vector.broadcast %20 : vector<1x128xf32> to vector<4x128xf32>
    %23 = arith.mulf %21, %22 : vector<4x128xf32>
    %24 = arith.addf %18, %23 : vector<4x128xf32>
    %25 = arith.addf %24, %1 : vector<4x128xf32>
    %c0_4 = arith.constant 0 : index
    %c0_5 = arith.constant 0 : index
    %26 = vector.load %arg5[%c0_4, %c0_5] : memref<32x4xf32, #tpu.memory_space<vmem>>, vector<32x4xf32>
    %cst_6 = arith.constant dense<0.000000e+00> : vector<32x128xf32>
    %27 = tpu.matmul %26, %25, %cst_6 {dimension_numbers = #tpu.dot_dimension_numbers<[1], [0], [0], [1], [0, 0, 1, 1], [], []>} : vector<32x4xf32>, vector<4x128xf32>, vector<32x128xf32> -> vector<32x128xf32>
    %c0_7 = arith.constant 0 : index
    %c0_8 = arith.constant 0 : index
    %28 = vector.load %arg2[%c0_7, %c0_8] : memref<32x128xf32, #tpu.memory_space<vmem>>, vector<32x128xf32>
    %29 = arith.mulf %27, %28 : vector<32x128xf32>
    %c0_9 = arith.constant 0 : index
    %c0_10 = arith.constant 0 : index
    %30 = vector.load %arg7[%c0_9, %c0_10] : memref<128x32xf32, #tpu.memory_space<vmem>>, vector<128x32xf32>
    %cst_11 = arith.constant dense<0.000000e+00> : vector<32x32xf32>
    %31 = tpu.matmul %29, %30, %cst_11 {dimension_numbers = #tpu.dot_dimension_numbers<[1], [0], [0], [1], [0, 0, 1, 1], [], []>} : vector<32x128xf32>, vector<128x32xf32>, vector<32x32xf32> -> vector<32x32xf32>
    %c0_12 = arith.constant 0 : index
    %c0_13 = arith.constant 0 : index
    %32 = vector.load %arg8[%c0_12, %c0_13] : memref<1x32xf32, #tpu.memory_space<vmem>>, vector<1x32xf32>
    %33 = vector.broadcast %32 : vector<1x32xf32> to vector<32x32xf32>
    %34 = arith.addf %31, %33 : vector<32x32xf32>
    %cst_14 = arith.constant 0.000000e+00 : f32
    %35 = vector.broadcast %cst_14 : f32 to vector<32x32xf32>
    %36 = arith.maximumf %34, %35 : vector<32x32xf32>
    %c0_15 = arith.constant 0 : index
    %c0_16 = arith.constant 0 : index
    %37 = vector.load %arg6[%c0_15, %c0_16] : memref<4x32xf32, #tpu.memory_space<vmem>>, vector<4x32xf32>
    %c0_17 = arith.constant 0 : index
    %c0_18 = arith.constant 0 : index
    %38 = vector.load %arg3[%c0_17, %c0_18] : memref<1x128xf32, #tpu.memory_space<vmem>>, vector<1x128xf32>
    %39 = vector.broadcast %38 : vector<1x128xf32> to vector<4x128xf32>
    %40 = arith.mulf %25, %39 : vector<4x128xf32>
    %c0_19 = arith.constant 0 : index
    %c0_20 = arith.constant 0 : index
    %41 = vector.load %arg4[%c0_19, %c0_20] : memref<128x32xf32, #tpu.memory_space<vmem>>, vector<128x32xf32>
    %cst_21 = arith.constant dense<0.000000e+00> : vector<4x32xf32>
    %42 = tpu.matmul %40, %41, %cst_21 {dimension_numbers = #tpu.dot_dimension_numbers<[1], [0], [0], [1], [0, 0, 1, 1], [], []>} : vector<4x128xf32>, vector<128x32xf32>, vector<4x32xf32> -> vector<4x32xf32>
    %43 = arith.mulf %37, %42 : vector<4x32xf32>
    %cst_22 = arith.constant dense<0.000000e+00> : vector<4x32xf32>
    %44 = tpu.matmul %43, %36, %cst_22 {dimension_numbers = #tpu.dot_dimension_numbers<[1], [0], [0], [1], [0, 0, 1, 1], [], []>} : vector<4x32xf32>, vector<32x32xf32>, vector<4x32xf32> -> vector<4x32xf32>
    %c0_23 = arith.constant 0 : index
    %c0_24 = arith.constant 0 : index
    %45 = vector.load %arg9[%c0_23, %c0_24] : memref<32x128xf32, #tpu.memory_space<vmem>>, vector<32x128xf32>
    %cst_25 = arith.constant dense<0.000000e+00> : vector<4x128xf32>
    %46 = tpu.matmul %44, %45, %cst_25 {dimension_numbers = #tpu.dot_dimension_numbers<[1], [0], [0], [1], [0, 0, 1, 1], [], []>} : vector<4x32xf32>, vector<32x128xf32>, vector<4x128xf32> -> vector<4x128xf32>
    %c0_26 = arith.constant 0 : index
    %c0_27 = arith.constant 0 : index
    %47 = vector.load %arg10[%c0_26, %c0_27] : memref<1x128xf32, #tpu.memory_space<vmem>>, vector<1x128xf32>
    %48 = vector.broadcast %47 : vector<1x128xf32> to vector<4x128xf32>
    %49 = arith.addf %46, %48 : vector<4x128xf32>
    %cst_28 = arith.constant dense<0xFF800000> : vector<4xf32>
    %50 = vector.multi_reduction <maximumf>, %49, %cst_28 [1] : vector<4x128xf32> to vector<4xf32>
    %51 = vector.shape_cast %50 : vector<4xf32> to vector<4x1xf32>
    %52 = vector.broadcast %51 : vector<4x1xf32> to vector<4x128xf32>
    %53 = arith.subf %49, %52 : vector<4x128xf32>
    %54 = math.exp %53 : vector<4x128xf32>
    %cst_29 = arith.constant dense<0.000000e+00> : vector<4xf32>
    %55 = vector.multi_reduction <add>, %54, %cst_29 [1] : vector<4x128xf32> to vector<4xf32>
    %56 = vector.shape_cast %55 : vector<4xf32> to vector<4x1xf32>
    %57 = tpu.reciprocal %56 {approx = true} : vector<4x1xf32> -> vector<4x1xf32>
    %58 = vector.broadcast %57 : vector<4x1xf32> to vector<4x128xf32>
    %59 = arith.mulf %54, %58 : vector<4x128xf32>
    %c0_30 = arith.constant 0 : index
    %c0_31 = arith.constant 0 : index
    %60 = vector.load %arg11[%c0_30, %c0_31] : memref<4x128xf32, #tpu.memory_space<vmem>>, vector<4x128xf32>
    tpu.vector_store %arg11[%c0_30, %c0_31], %59 {strides = array<i32>} : memref<4x128xf32, #tpu.memory_space<vmem>>, vector<4x128xf32>,
    return
  }
}

</mosaic_0001>

<llo_original>
// kernel: explainer_forward_pns.1
$region0: #{explainer_forward_pns.1}
  #allocation0 [shape = 'u32[]', space=smem, size = 0x4, offset = 0x4, fixed_abs, tag = 'smem constant byte address 0x4 - core index']
  #allocation1 [shape = 'u32[144,128]{1,0:T(1,128)}', space=vmem, size = 0x12000, scoped, tag = 'internal scratch']
  %s0 = inlined_call_operand.vmem [shape: f32[1,128], index: 0, kind: input, shape index: {}]
  %s1 = inlined_call_operand.vmem [shape: f32[4,128], index: 1, kind: input, shape index: {}]
  %s2 = inlined_call_operand.vmem [shape: f32[32,128], index: 2, kind: input, shape index: {}]
  %s3 = inlined_call_operand.vmem [shape: f32[1,128], index: 3, kind: input, shape index: {}]
  %s4 = inlined_call_operand.vmem [shape: f32[128,32], index: 4, kind: input, shape index: {}]
  %s5 = inlined_call_operand.vmem [shape: f32[32,4], index: 5, kind: input, shape index: {}]
  %s6 = inlined_call_operand.vmem [shape: f32[4,32], index: 6, kind: input, shape index: {}]
  %s7 = inlined_call_operand.vmem [shape: f32[128,32], index: 7, kind: input, shape index: {}]
  %s8 = inlined_call_operand.vmem [shape: f32[1,32], index: 8, kind: input, shape index: {}]
  %s9 = inlined_call_operand.vmem [shape: f32[32,128], index: 9, kind: input, shape index: {}]
  %s10 = inlined_call_operand.vmem [shape: f32[1,128], index: 10, kind: input, shape index: {}]
  %s11 = inlined_call_operand.vmem [shape: f32[4,128], index: 11, kind: output, shape index: {}]
  %s12 = sld [smem:[#allocation0]]
  $region54: #{explainer_forward_pns.1} parent=0
    _
  %s14 = ssub.s32 1, %s12
  %s15 = scalar_select 0, %s14, %s12
  // Predicated region
  $region2: #{explainer_forward_pns.1} parent=0 // pred_check
    _
  $region3: #{explainer_forward_pns.1} parent=0 // pred_check_branch
    %17 = sbr.rel (0) target = $region5
  $region4: #{explainer_forward_pns.1} parent=0 // pred_region
    _
  $region5: #{explainer_forward_pns.1} parent=0 // pred_fallthru
    _
  // Predicated region
  $region6: #{explainer_forward_pns.1} parent=0 // pred_check
    _
  $region7: #{explainer_forward_pns.1} parent=0 // pred_check_branch
    %19 = sbr.rel (0) target = $region9
  $region8: #{explainer_forward_pns.1} parent=0 // pred_region
    _
  $region9: #{explainer_forward_pns.1} parent=0 // pred_fallthru
    _
  // Predicated region
  $region10: #{explainer_forward_pns.1} parent=0 // pred_check
    _
  $region11: #{explainer_forward_pns.1} parent=0 // pred_check_branch
    %21 = sbr.rel (0) target = $region13
  $region12: #{explainer_forward_pns.1} parent=0 // pred_region
    _
  $region13: #{explainer_forward_pns.1} parent=0 // pred_fallthru
    _
  // Predicated region
  $region14: #{explainer_forward_pns.1} parent=0 // pred_check
    _
  $region15: #{explainer_forward_pns.1} parent=0 // pred_check_branch
    %23 = sbr.rel (0) target = $region17
  $region16: #{explainer_forward_pns.1} parent=0 // pred_region
    _
  $region17: #{explainer_forward_pns.1} parent=0 // pred_fallthru
    _
  // Predicated region
  $region18: #{explainer_forward_pns.1} parent=0 // pred_check
    _
  $region19: #{explainer_forward_pns.1} parent=0 // pred_check_branch
    %25 = sbr.rel (0) target = $region21
  $region20: #{explainer_forward_pns.1} parent=0 // pred_region
    _
  $region21: #{explainer_forward_pns.1} parent=0 // pred_fallthru
    _
  // Predicated region
  $region22: #{explainer_forward_pns.1} parent=0 // pred_check
    _
  $region23: #{explainer_forward_pns.1} parent=0 // pred_check_branch
    %27 = sbr.rel (0) target = $region25
  $region24: #{explainer_forward_pns.1} parent=0 // pred_region
    _
  $region25: #{explainer_forward_pns.1} parent=0 // pred_fallthru
    _
  // Predicated region
  $region26: #{explainer_forward_pns.1} parent=0 // pred_check
    _
  $region27: #{explainer_forward_pns.1} parent=0 // pred_check_branch
    %29 = sbr.rel (0) target = $region29
  $region28: #{explainer_forward_pns.1} parent=0 // pred_region
    _
  $region29: #{explainer_forward_pns.1} parent=0 // pred_fallthru
    _
  // Predicated region
  $region30: #{explainer_forward_pns.1} parent=0 // pred_check
    _
  $region31: #{explainer_forward_pns.1} parent=0 // pred_check_branch
    %31 = sbr.rel (0) target = $region33
  $region32: #{explainer_forward_pns.1} parent=0 // pred_region
    _
  $region33: #{explainer_forward_pns.1} parent=0 // pred_fallthru
    _
  // Predicated region
  $region34: #{explainer_forward_pns.1} parent=0 // pred_check
    _
  $region35: #{explainer_forward_pns.1} parent=0 // pred_check_branch
    %33 = sbr.rel (0) target = $region37
  $region36: #{explainer_forward_pns.1} parent=0 // pred_region
    _
  $region37: #{explainer_forward_pns.1} parent=0 // pred_fallthru
    _
  // Predicated region
  $region38: #{explainer_forward_pns.1} parent=0 // pred_check
    _
  $region39: #{explainer_forward_pns.1} parent=0 // pred_check_branch
    %35 = sbr.rel (0) target = $region41
  $region40: #{explainer_forward_pns.1} parent=0 // pred_region
    _
  $region41: #{explainer_forward_pns.1} parent=0 // pred_fallthru
    _
  // Predicated region
  $region42: #{explainer_forward_pns.1} parent=0 // pred_check
    _
  $region43: #{explainer_forward_pns.1} parent=0 // pred_check_branch
    %37 = sbr.rel (0) target = $region45
  $region44: #{explainer_forward_pns.1} parent=0 // pred_region
    _
  $region45: #{explainer_forward_pns.1} parent=0 // pred_fallthru
    _
  %v38 = vld [vmem:[%s0] sm:$0x1]
  %v39 = vld [vmem:[%s1] sm:$0xf]
  %v40 = vlaneseq
  %v41 = vshrl.u32 %v40, 7
  %vm42 = vcmp.eq.s32.totalorder %v41, 0
  %v43 = vsel %vm42, 1, 0
  %v44 = vcvt.s32.f32 %v43
  %vm45 = vcmp.eq.s32.totalorder %v41, 1
  %v46 = vsel %vm45, 1, 0
  %v47 = vcvt.s32.f32 %v46
  %v48 = vsub.f32 1.0, %v44
  %v49 = vsub.f32 %v48, %v47
  %v51 = vlaneseq
  %v52 = vshrl.u32 %v51, 7
  %v53 = vsub.s32 0, %v52
  %v54 = vrot.slane %v38, %v53
  %v56 = vmul.f32 %v47, %v54
  %v57 = vadd.f32 %v44, %v56
  %v58 = vsub.f32 1.0, %v38
  %v60 = vlaneseq
  %v61 = vshrl.u32 %v60, 7
  %v62 = vsub.s32 0, %v61
  %v63 = vrot.slane %v58, %v62
  %v65 = vmul.f32 %v49, %v63
  %v66 = vadd.f32 %v57, %v65
  %v67 = vadd.f32 %v66, %v39
  %v68 = vld [vmem:[%s5] sm:$0xff]
  %v69 = vld [vmem:[%s5 + $0x8] sm:$0xff]
  %v70 = vld [vmem:[%s5 + $0x10] sm:$0xff]
  %v71 = vld [vmem:[%s5 + $0x18] sm:$0xff]
  %vm72 = vcmask 31744
  %v74 = vsel %vm72, %v68, 0
  %v77 = vsel %vm72, %v69, 0
  %v80 = vsel %vm72, %v70, 0
  %v83 = vsel %vm72, %v71, 0
  %vm85 = vcmask 1043456
  %v87 = vsel %vm85, %v67, 0
  %89 = vmatprep.subr.mxu0 0.0
  %90 = vmatpush1.msra.mxu0 0.0
  %91 = vmatprep.subr.mxu0 0.0
  %92 = vmatpush1.msra.mxu0 0.0
  %93 = vmatprep.subr.mxu0 0.0
  %94 = vmatpush1.msra.mxu0 0.0
  %95 = vmatprep.subr.mxu0 0.0
  %96 = vmatpush1.msra.mxu0 0.0
  %97 = vmatprep.subr.mxu0 0.0
  %98 = vmatpush1.msra.mxu0 0.0
  %99 = vmatprep.subr.mxu0 0.0
  %100 = vmatpush1.msra.mxu0 0.0
  %101 = vmatprep.subr.mxu0 0.0
  %102 = vmatpush1.msra.mxu0 0.0
  %103 = vmatprep.subr.mxu0 0.0
  %104 = vmatpush1.msra.mxu0 0.0
  %105 = vmatprep.subr.mxu0 0.0
  %106 = vmatpush1.msra.mxu0 0.0
  %107 = vmatprep.subr.mxu0 0.0
  %108 = vmatpush1.msra.mxu0 0.0
  %109 = vmatprep.subr.mxu0 0.0
  %110 = vmatpush1.msra.mxu0 0.0
  %111 = vmatprep.subr.mxu0 0.0
  %112 = vmatpush1.msra.mxu0 0.0
  %113 = vmatprep.subr.mxu0 0.0
  %114 = vmatpush1.msra.mxu0 0.0
  %115 = vmatprep.subr.mxu0 0.0
  %116 = vmatpush1.msra.mxu0 0.0
  %117 = vmatprep.subr.mxu0 0.0
  %118 = vmatpush1.msra.mxu0 0.0
  %119 = vmatprep.subr.mxu0 0.0
  %120 = vmatpush1.msra.mxu0 %v87
  %121 = vmatprep.subr.mxu0 0.0
  %122 = vmatpush2.msra.mxu0 0.0
  %123 = vmatprep.subr.mxu0 0.0
  %124 = vmatpush2.msra.mxu0 0.0
  %125 = vmatprep.subr.mxu0 0.0
  %126 = vmatpush2.msra.mxu0 0.0
  %127 = vmatprep.subr.mxu0 0.0
  %128 = vmatpush2.msra.mxu0 0.0
  %129 = vmatprep.subr.mxu0 0.0
  %130 = vmatpush2.msra.mxu0 0.0
  %131 = vmatprep.subr.mxu0 0.0
  %132 = vmatpush2.msra.mxu0 0.0
  %133 = vmatprep.subr.mxu0 0.0
  %134 = vmatpush2.msra.mxu0 0.0
  %135 = vmatprep.subr.mxu0 0.0
  %136 = vmatpush2.msra.mxu0 0.0
  %137 = vmatprep.subr.mxu0 0.0
  %138 = vmatpush2.msra.mxu0 0.0
  %139 = vmatprep.subr.mxu0 0.0
  %140 = vmatpush2.msra.mxu0 0.0
  %141 = vmatprep.subr.mxu0 0.0
  %142 = vmatpush2.msra.mxu0 0.0
  %143 = vmatprep.subr.mxu0 0.0
  %144 = vmatpush2.msra.mxu0 0.0
  %145 = vmatprep.subr.mxu0 0.0
  %146 = vmatpush2.msra.mxu0 0.0
  %147 = vmatprep.subr.mxu0 0.0
  %148 = vmatpush2.msra.mxu0 0.0
  %149 = vmatprep.subr.mxu0 0.0
  %150 = vmatpush2.msra.mxu0 0.0
  %151 = vmatprep.subr.mxu0 0.0
  %152 = vmatpush2.msra.mxu0 0.0
  %153 = vmatprep.mubr.f32.mxu0 0.0
  %154 = vmatmul.mubr.f32.gmra.mxu0 %v74
  %v155 = vpop.f32.mrf.mxu0
  %v156 = vadd.f32 0.0, %v155
  %v157 = vpop.f32.mrf.mxu0
  %158 = vmatprep.mubr.f32.mxu0 0.0
  %159 = vmatmul.mubr.f32.gmra.mxu0 %v77
  %v160 = vpop.f32.mrf.mxu0
  %v161 = vadd.f32 0.0, %v160
  %v162 = vpop.f32.mrf.mxu0
  %163 = vmatprep.mubr.f32.mxu0 0.0
  %164 = vmatmul.mubr.f32.gmra.mxu0 %v80
  %v165 = vpop.f32.mrf.mxu0
  %v166 = vadd.f32 0.0, %v165
  %v167 = vpop.f32.mrf.mxu0
  %168 = vmatprep.mubr.f32.mxu0 0.0
  %169 = vmatmul.mubr.f32.gmra.mxu0 %v83
  %v170 = vpop.f32.mrf.mxu0
  %v171 = vadd.f32 0.0, %v170
  %v172 = vpop.f32.mrf.mxu0
  %173 = vdwg.mxu0
  %v174 = vld [vmem:[%s2] sm:$0xff]
  %v175 = vld [vmem:[%s2 + $0x8] sm:$0xff]
  %v176 = vld [vmem:[%s2 + $0x10] sm:$0xff]
  %v177 = vld [vmem:[%s2 + $0x18] sm:$0xff]
  %v178 = vmul.f32 %v156, %v174
  %v179 = vmul.f32 %v161, %v175
  %v180 = vmul.f32 %v166, %v176
  %v181 = vmul.f32 %v171, %v177
  %v182 = vld [vmem:[%s7] sm:$0xff]
  %v183 = vld [vmem:[%s7 + $0x8] sm:$0xff]
  %v184 = vld [vmem:[%s7 + $0x10] sm:$0xff]
  %v185 = vld [vmem:[%s7 + $0x18] sm:$0xff]
  %v186 = vld [vmem:[%s7 + $0x20] sm:$0xff]
  %v187 = vld [vmem:[%s7 + $0x28] sm:$0xff]
  %v188 = vld [vmem:[%s7 + $0x30] sm:$0xff]
  %v189 = vld [vmem:[%s7 + $0x38] sm:$0xff]
  %v190 = vld [vmem:[%s7 + $0x40] sm:$0xff]
  %v191 = vld [vmem:[%s7 + $0x48] sm:$0xff]
  %v192 = vld [vmem:[%s7 + $0x50] sm:$0xff]
  %v193 = vld [vmem:[%s7 + $0x58] sm:$0xff]
  %v194 = vld [vmem:[%s7 + $0x60] sm:$0xff]
  %v195 = vld [vmem:[%s7 + $0x68] sm:$0xff]
  %v196 = vld [vmem:[%s7 + $0x70] sm:$0xff]
  %v197 = vld [vmem:[%s7 + $0x78] sm:$0xff]
  %v198 = vld [vmem:[%s8] sm:$0x1]
  %v200 = vlaneseq
  %v201 = vshrl.u32 %v200, 7
  %v202 = vsub.s32 0, %v201
  %v203 = vrot.slane %v198, %v202
  %205 = vmatprep.subr.mxu0 0.0
  %206 = vmatpush1.msra.mxu0 %v197
  %207 = vmatprep.subr.mxu0 0.0
  %208 = vmatpush1.msra.mxu0 %v196
  %209 = vmatprep.subr.mxu0 0.0
  %210 = vmatpush1.msra.mxu0 %v195
  %211 = vmatprep.subr.mxu0 0.0
  %212 = vmatpush1.msra.mxu0 %v194
  %213 = vmatprep.subr.mxu0 0.0
  %214 = vmatpush1.msra.mxu0 %v193
  %215 = vmatprep.subr.mxu0 0.0
  %216 = vmatpush1.msra.mxu0 %v192
  %217 = vmatprep.subr.mxu0 0.0
  %218 = vmatpush1.msra.mxu0 %v191
  %219 = vmatprep.subr.mxu0 0.0
  %220 = vmatpush1.msra.mxu0 %v190
  %221 = vmatprep.subr.mxu0 0.0
  %222 = vmatpush1.msra.mxu0 %v189
  %223 = vmatprep.subr.mxu0 0.0
  %224 = vmatpush1.msra.mxu0 %v188
  %225 = vmatprep.subr.mxu0 0.0
  %226 = vmatpush1.msra.mxu0 %v187
  %227 = vmatprep.subr.mxu0 0.0
  %228 = vmatpush1.msra.mxu0 %v186
  %229 = vmatprep.subr.mxu0 0.0
  %230 = vmatpush1.msra.mxu0 %v185
  %231 = vmatprep.subr.mxu0 0.0
  %232 = vmatpush1.msra.mxu0 %v184
  %233 = vmatprep.subr.mxu0 0.0
  %234 = vmatpush1.msra.mxu0 %v183
  %235 = vmatprep.subr.mxu0 0.0
  %236 = vmatpush1.msra.mxu0 %v182
  %237 = vmatprep.subr.mxu0 0.0
  %238 = vmatpush2.msra.mxu0 0.0
  %239 = vmatprep.subr.mxu0 0.0
  %240 = vmatpush2.msra.mxu0 0.0
  %241 = vmatprep.subr.mxu0 0.0
  %242 = vmatpush2.msra.mxu0 0.0
  %243 = vmatprep.subr.mxu0 0.0
  %244 = vmatpush2.msra.mxu0 0.0
  %245 = vmatprep.subr.mxu0 0.0
  %246 = vmatpush2.msra.mxu0 0.0
  %247 = vmatprep.subr.mxu0 0.0
  %248 = vmatpush2.msra.mxu0 0.0
  %249 = vmatprep.subr.mxu0 0.0
  %250 = vmatpush2.msra.mxu0 0.0
  %251 = vmatprep.subr.mxu0 0.0
  %252 = vmatpush2.msra.mxu0 0.0
  %253 = vmatprep.subr.mxu0 0.0
  %254 = vmatpush2.msra.mxu0 0.0
  %255 = vmatprep.subr.mxu0 0.0
  %256 = vmatpush2.msra.mxu0 0.0
  %257 = vmatprep.subr.mxu0 0.0
  %258 = vmatpush2.msra.mxu0 0.0
  %259 = vmatprep.subr.mxu0 0.0
  %260 = vmatpush2.msra.mxu0 0.0
  %261 = vmatprep.subr.mxu0 0.0
  %262 = vmatpush2.msra.mxu0 0.0
  %263 = vmatprep.subr.mxu0 0.0
  %264 = vmatpush2.msra.mxu0 0.0
  %265 = vmatprep.subr.mxu0 0.0
  %266 = vmatpush2.msra.mxu0 0.0
  %267 = vmatprep.subr.mxu0 0.0
  %268 = vmatpush2.msra.mxu0 0.0
  %269 = vmatprep.mubr.f32.mxu0 0.0
  %270 = vmatmul.mubr.f32.gmra.mxu0 %v178
  %v271 = vpop.f32.mrf.mxu0
  %v272 = vadd.f32 %v203, %v271
  %v273 = vpop.f32.mrf.mxu0
  %274 = vmatprep.mubr.f32.mxu0 0.0
  %275 = vmatmul.mubr.f32.gmra.mxu0 %v179
  %v276 = vpop.f32.mrf.mxu0
  %v277 = vadd.f32 %v203, %v276
  %v278 = vpop.f32.mrf.mxu0
  %279 = vmatprep.mubr.f32.mxu0 0.0
  %280 = vmatmul.mubr.f32.gmra.mxu0 %v180
  %v281 = vpop.f32.mrf.mxu0
  %v282 = vadd.f32 %v203, %v281
  %v283 = vpop.f32.mrf.mxu0
  %284 = vmatprep.mubr.f32.mxu0 0.0
  %285 = vmatmul.mubr.f32.gmra.mxu0 %v181
  %v286 = vpop.f32.mrf.mxu0
  %v287 = vadd.f32 %v203, %v286
  %v288 = vpop.f32.mrf.mxu0
  %289 = vdwg.mxu0
  %v290 = vmax.f32 %v272, 0.0
  %v291 = vmax.f32 %v277, 0.0
  %v292 = vmax.f32 %v282, 0.0
  %v293 = vmax.f32 %v287, 0.0
  %v294 = vld [vmem:[%s6] sm:$0xf]
  %v295 = vld [vmem:[%s3] sm:$0x1]
  %v297 = vlaneseq
  %v298 = vshrl.u32 %v297, 7
  %v299 = vsub.s32 0, %v298
  %v300 = vrot.slane %v295, %v299
  %v302 = vmul.f32 %v67, %v300
  %v303 = vld [vmem:[%s4] sm:$0xff]
  %v304 = vld [vmem:[%s4 + $0x8] sm:$0xff]
  %v305 = vld [vmem:[%s4 + $0x10] sm:$0xff]
  %v306 = vld [vmem:[%s4 + $0x18] sm:$0xff]
  %v307 = vld [vmem:[%s4 + $0x20] sm:$0xff]
  %v308 = vld [vmem:[%s4 + $0x28] sm:$0xff]
  %v309 = vld [vmem:[%s4 + $0x30] sm:$0xff]
  %v310 = vld [vmem:[%s4 + $0x38] sm:$0xff]
  %v311 = vld [vmem:[%s4 + $0x40] sm:$0xff]
  %v312 = vld [vmem:[%s4 + $0x48] sm:$0xff]
  %v313 = vld [vmem:[%s4 + $0x50] sm:$0xff]
  %v314 = vld [vmem:[%s4 + $0x58] sm:$0xff]
  %v315 = vld [vmem:[%s4 + $0x60] sm:$0xff]
  %v316 = vld [vmem:[%s4 + $0x68] sm:$0xff]
  %v317 = vld [vmem:[%s4 + $0x70] sm:$0xff]
  %v318 = vld [vmem:[%s4 + $0x78] sm:$0xff]
  %319 = vmatprep.subr.mxu0 0.0
  %320 = vmatpush1.msra.mxu0 %v318
  %321 = vmatprep.subr.mxu0 0.0
  %322 = vmatpush1.msra.mxu0 %v317
  %323 = vmatprep.subr.mxu0 0.0
  %324 = vmatpush1.msra.mxu0 %v316
  %325 = vmatprep.subr.mxu0 0.0
  %326 = vmatpush1.msra.mxu0 %v315
  %327 = vmatprep.subr.mxu0 0.0
  %328 = vmatpush1.msra.mxu0 %v314
  %329 = vmatprep.subr.mxu0 0.0
  %330 = vmatpush1.msra.mxu0 %v313
  %331 = vmatprep.subr.mxu0 0.0
  %332 = vmatpush1.msra.mxu0 %v312
  %333 = vmatprep.subr.mxu0 0.0
  %334 = vmatpush1.msra.mxu0 %v311
  %335 = vmatprep.subr.mxu0 0.0
  %336 = vmatpush1.msra.mxu0 %v310
  %337 = vmatprep.subr.mxu0 0.0
  %338 = vmatpush1.msra.mxu0 %v309
  %339 = vmatprep.subr.mxu0 0.0
  %340 = vmatpush1.msra.mxu0 %v308
  %341 = vmatprep.subr.mxu0 0.0
  %342 = vmatpush1.msra.mxu0 %v307
  %343 = vmatprep.subr.mxu0 0.0
  %344 = vmatpush1.msra.mxu0 %v306
  %345 = vmatprep.subr.mxu0 0.0
  %346 = vmatpush1.msra.mxu0 %v305
  %347 = vmatprep.subr.mxu0 0.0
  %348 = vmatpush1.msra.mxu0 %v304
  %349 = vmatprep.subr.mxu0 0.0
  %350 = vmatpush1.msra.mxu0 %v303
  %351 = vmatprep.subr.mxu0 0.0
  %352 = vmatpush2.msra.mxu0 0.0
  %353 = vmatprep.subr.mxu0 0.0
  %354 = vmatpush2.msra.mxu0 0.0
  %355 = vmatprep.subr.mxu0 0.0
  %356 = vmatpush2.msra.mxu0 0.0
  %357 = vmatprep.subr.mxu0 0.0
  %358 = vmatpush2.msra.mxu0 0.0
  %359 = vmatprep.subr.mxu0 0.0
  %360 = vmatpush2.msra.mxu0 0.0
  %361 = vmatprep.subr.mxu0 0.0
  %362 = vmatpush2.msra.mxu0 0.0
  %363 = vmatprep.subr.mxu0 0.0
  %364 = vmatpush2.msra.mxu0 0.0
  %365 = vmatprep.subr.mxu0 0.0
  %366 = vmatpush2.msra.mxu0 0.0
  %367 = vmatprep.subr.mxu0 0.0
  %368 = vmatpush2.msra.mxu0 0.0
  %369 = vmatprep.subr.mxu0 0.0
  %370 = vmatpush2.msra.mxu0 0.0
  %371 = vmatprep.subr.mxu0 0.0
  %372 = vmatpush2.msra.mxu0 0.0
  %373 = vmatprep.subr.mxu0 0.0
  %374 = vmatpush2.msra.mxu0 0.0
  %375 = vmatprep.subr.mxu0 0.0
  %376 = vmatpush2.msra.mxu0 0.0
  %377 = vmatprep.subr.mxu0 0.0
  %378 = vmatpush2.msra.mxu0 0.0
  %379 = vmatprep.subr.mxu0 0.0
  %380 = vmatpush2.msra.mxu0 0.0
  %381 = vmatprep.subr.mxu0 0.0
  %382 = vmatpush2.msra.mxu0 0.0
  %383 = vmatprep.mubr.f32.mxu0 0.0
  %384 = vmatmul.mubr.f32.gmra.mxu0 %v302
  %v385 = vpop.f32.mrf.mxu0
  %v386 = vadd.f32 0.0, %v385
  %v387 = vpop.f32.mrf.mxu0
  %388 = vdwg.mxu0
  %v389 = vmul.f32 %v294, %v386
  %vm390 = vcmask 261120
  %v392 = vsel %vm390, %v389, 0
  %394 = vmatprep.subr.mxu0 0.0
  %395 = vmatpush1.msra.mxu0 0.0
  %396 = vmatprep.subr.mxu0 0.0
  %397 = vmatpush1.msra.mxu0 0.0
  %398 = vmatprep.subr.mxu0 0.0
  %399 = vmatpush1.msra.mxu0 0.0
  %400 = vmatprep.subr.mxu0 0.0
  %401 = vmatpush1.msra.mxu0 0.0
  %402 = vmatprep.subr.mxu0 0.0
  %403 = vmatpush1.msra.mxu0 0.0
  %404 = vmatprep.subr.mxu0 0.0
  %405 = vmatpush1.msra.mxu0 0.0
  %406 = vmatprep.subr.mxu0 0.0
  %407 = vmatpush1.msra.mxu0 0.0
  %408 = vmatprep.subr.mxu0 0.0
  %409 = vmatpush1.msra.mxu0 0.0
  %410 = vmatprep.subr.mxu0 0.0
  %411 = vmatpush1.msra.mxu0 0.0
  %412 = vmatprep.subr.mxu0 0.0
  %413 = vmatpush1.msra.mxu0 0.0
  %414 = vmatprep.subr.mxu0 0.0
  %415 = vmatpush1.msra.mxu0 0.0
  %416 = vmatprep.subr.mxu0 0.0
  %417 = vmatpush1.msra.mxu0 0.0
  %418 = vmatprep.subr.mxu0 0.0
  %419 = vmatpush1.msra.mxu0 %v293
  %420 = vmatprep.subr.mxu0 0.0
  %421 = vmatpush1.msra.mxu0 %v292
  %422 = vmatprep.subr.mxu0 0.0
  %423 = vmatpush1.msra.mxu0 %v291
  %424 = vmatprep.subr.mxu0 0.0
  %425 = vmatpush1.msra.mxu0 %v290
  %426 = vmatprep.subr.mxu0 0.0
  %427 = vmatpush2.msra.mxu0 0.0
  %428 = vmatprep.subr.mxu0 0.0
  %429 = vmatpush2.msra.mxu0 0.0
  %430 = vmatprep.subr.mxu0 0.0
  %431 = vmatpush2.msra.mxu0 0.0
  %432 = vmatprep.subr.mxu0 0.0
  %433 = vmatpush2.msra.mxu0 0.0
  %434 = vmatprep.subr.mxu0 0.0
  %435 = vmatpush2.msra.mxu0 0.0
  %436 = vmatprep.subr.mxu0 0.0
  %437 = vmatpush2.msra.mxu0 0.0
  %438 = vmatprep.subr.mxu0 0.0
  %439 = vmatpush2.msra.mxu0 0.0
  %440 = vmatprep.subr.mxu0 0.0
  %441 = vmatpush2.msra.mxu0 0.0
  %442 = vmatprep.subr.mxu0 0.0
  %443 = vmatpush2.msra.mxu0 0.0
  %444 = vmatprep.subr.mxu0 0.0
  %445 = vmatpush2.msra.mxu0 0.0
  %446 = vmatprep.subr.mxu0 0.0
  %447 = vmatpush2.msra.mxu0 0.0
  %448 = vmatprep.subr.mxu0 0.0
  %449 = vmatpush2.msra.mxu0 0.0
  %450 = vmatprep.subr.mxu0 0.0
  %451 = vmatpush2.msra.mxu0 0.0
  %452 = vmatprep.subr.mxu0 0.0
  %453 = vmatpush2.msra.mxu0 0.0
  %454 = vmatprep.subr.mxu0 0.0
  %455 = vmatpush2.msra.mxu0 0.0
  %456 = vmatprep.subr.mxu0 0.0
  %457 = vmatpush2.msra.mxu0 0.0
  %458 = vmatprep.mubr.f32.mxu0 0.0
  %459 = vmatmul.mubr.f32.gmra.mxu0 %v392
  %v460 = vpop.f32.mrf.mxu0
  %v461 = vadd.f32 0.0, %v460
  %v462 = vpop.f32.mrf.mxu0
  %463 = vdwg.mxu0
  %v464 = vld [vmem:[%s9] sm:$0xff]
  %v465 = vld [vmem:[%s9 + $0x8] sm:$0xff]
  %v466 = vld [vmem:[%s9 + $0x10] sm:$0xff]
  %v467 = vld [vmem:[%s9 + $0x18] sm:$0xff]
  %v468 = vld [vmem:[%s10] sm:$0x1]
  %v470 = vlaneseq
  %v471 = vshrl.u32 %v470, 7
  %v472 = vsub.s32 0, %v471
  %v473 = vrot.slane %v468, %v472
  %v476 = vsel %vm390, %v461, 0
  %478 = vmatprep.subr.mxu0 0.0
  %479 = vmatpush1.msra.mxu0 0.0
  %480 = vmatprep.subr.mxu0 0.0
  %481 = vmatpush1.msra.mxu0 0.0
  %482 = vmatprep.subr.mxu0 0.0
  %483 = vmatpush1.msra.mxu0 0.0
  %484 = vmatprep.subr.mxu0 0.0
  %485 = vmatpush1.msra.mxu0 0.0
  %486 = vmatprep.subr.mxu0 0.0
  %487 = vmatpush1.msra.mxu0 0.0
  %488 = vmatprep.subr.mxu0 0.0
  %489 = vmatpush1.msra.mxu0 0.0
  %490 = vmatprep.subr.mxu0 0.0
  %491 = vmatpush1.msra.mxu0 0.0
  %492 = vmatprep.subr.mxu0 0.0
  %493 = vmatpush1.msra.mxu0 0.0
  %494 = vmatprep.subr.mxu0 0.0
  %495 = vmatpush1.msra.mxu0 0.0
  %496 = vmatprep.subr.mxu0 0.0
  %497 = vmatpush1.msra.mxu0 0.0
  %498 = vmatprep.subr.mxu0 0.0
  %499 = vmatpush1.msra.mxu0 0.0
  %500 = vmatprep.subr.mxu0 0.0
  %501 = vmatpush1.msra.mxu0 0.0
  %502 = vmatprep.subr.mxu0 0.0
  %503 = vmatpush1.msra.mxu0 %v467
  %504 = vmatprep.subr.mxu0 0.0
  %505 = vmatpush1.msra.mxu0 %v466
  %506 = vmatprep.subr.mxu0 0.0
  %507 = vmatpush1.msra.mxu0 %v465
  %508 = vmatprep.subr.mxu0 0.0
  %509 = vmatpush1.msra.mxu0 %v464
  %510 = vmatprep.subr.mxu0 0.0
  %511 = vmatpush2.msra.mxu0 0.0
  %512 = vmatprep.subr.mxu0 0.0
  %513 = vmatpush2.msra.mxu0 0.0
  %514 = vmatprep.subr.mxu0 0.0
  %515 = vmatpush2.msra.mxu0 0.0
  %516 = vmatprep.subr.mxu0 0.0
  %517 = vmatpush2.msra.mxu0 0.0
  %518 = vmatprep.subr.mxu0 0.0
  %519 = vmatpush2.msra.mxu0 0.0
  %520 = vmatprep.subr.mxu0 0.0
  %521 = vmatpush2.msra.mxu0 0.0
  %522 = vmatprep.subr.mxu0 0.0
  %523 = vmatpush2.msra.mxu0 0.0
  %524 = vmatprep.subr.mxu0 0.0
  %525 = vmatpush2.msra.mxu0 0.0
  %526 = vmatprep.subr.mxu0 0.0
  %527 = vmatpush2.msra.mxu0 0.0
  %528 = vmatprep.subr.mxu0 0.0
  %529 = vmatpush2.msra.mxu0 0.0
  %530 = vmatprep.subr.mxu0 0.0
  %531 = vmatpush2.msra.mxu0 0.0
  %532 = vmatprep.subr.mxu0 0.0
  %533 = vmatpush2.msra.mxu0 0.0
  %534 = vmatprep.subr.mxu0 0.0
  %535 = vmatpush2.msra.mxu0 0.0
  %536 = vmatprep.subr.mxu0 0.0
  %537 = vmatpush2.msra.mxu0 0.0
  %538 = vmatprep.subr.mxu0 0.0
  %539 = vmatpush2.msra.mxu0 0.0
  %540 = vmatprep.subr.mxu0 0.0
  %541 = vmatpush2.msra.mxu0 0.0
  %542 = vmatprep.mubr.f32.mxu0 0.0
  %543 = vmatmul.mubr.f32.gmra.mxu0 %v476
  %v544 = vpop.f32.mrf.mxu0
  %v545 = vadd.f32 %v473, %v544
  %v546 = vpop.f32.mrf.mxu0
  %547 = vdwg.mxu0
  %v548 = vsel %vm85, %v545, -inf
  %549 = vmax.xlane.f32.xlu0 %v548
  %v550 = vpop.xlane.xlu0 %549
  %v551 = vsub.f32 %v545, %v550
  %v552 = vmul.f32 %v551, 1.442695
  %v553 = vpow.pop %v552
  %v554 = vsel %vm85, %v553, 0.0
  %555 = vadd.xlane.f32.xlu0 %v554
  %v556 = vpop.xlane.xlu0 %555
  %v557 = vrcp.pop %v556
  %v558 = vmul.f32 %v553, %v557
  %559 = vst [vmem:[%s11] sm:$0xf] %v558
  // Predicated region
  $region46: #{explainer_forward_pns.1} parent=0 // pred_check
    _
  $region47: #{explainer_forward_pns.1} parent=0 // pred_check_branch
    %561 = sbr.rel (0) target = $region49
  $region48: #{explainer_forward_pns.1} parent=0 // pred_region
    _
  $region49: #{explainer_forward_pns.1} parent=0 // pred_fallthru
    _
  // Predicated region
  $region50: #{explainer_forward_pns.1} parent=0 // pred_check
    _
  $region51: #{explainer_forward_pns.1} parent=0 // pred_check_branch
    %563 = sbr.rel (0) target = $region53
  $region52: #{explainer_forward_pns.1} parent=0 // pred_region
    _
  $region53: #{explainer_forward_pns.1} parent=0 // pred_fallthru
    _

</llo_original>
